<compile_context>
chip_gen: v5e
topology: v5e:2x2
jax: 0.10.0
libtpu: 0.0.40
codegen_flags: <defaults>
</compile_context>

<pallas_src>
import jax
import jax.numpy as jnp
from jax import lax
from jax.experimental import pallas as pl
from jax.experimental.pallas import tpu as pltpu


# ----------------------------- Pallas kernel (DetectionHead) -----------------------------

def _det_head_kernel(x_ref, w_ref, b_ref, o_ref):
    # x_ref: (Cin, T)   w_ref: (Cout, Cin)   b_ref: (Cout, 1)   o_ref: (Cout, T)
    acc = jnp.dot(w_ref[...], x_ref[...], preferred_element_type=jnp.float32)
    acc = acc + b_ref[...]                       # broadcast (Cout, 1) across lanes
    o_ref[...] = jax.nn.sigmoid(acc).astype(o_ref.dtype)


def detection_head_forward(x_nchw, weight, bias, num_anchors, num_classes,
                           *, tile_hw=2048, out_dtype=jnp.float32):
    """1x1 conv -> view -> permute -> sigmoid, matching torch's DetectionHead.

    x_nchw: (B, 64, H, W); weight: (Cout, 64, 1, 1); bias: (Cout,)
    returns (B, num_anchors, H, W, 5 + num_classes).
    """
    B, Cin, H, W = x_nchw.shape
    Cout = weight.shape[0]
    assert Cout == num_anchors * (5 + num_classes)

    HW = H * W
    # Free reshape (no data movement) — the conv reads straight from NCHW layout.
    x3 = x_nchw.reshape(B, Cin, HW)

    # Spatial tile: multiple of 128 lanes, as large as tile_hw allows.
    # (For realistic detector feature maps this yields >= 8 grid steps, keeping
    #  both v7x TensorCores busy while staying DMA-efficient.)
    thw = max(128, min(tile_hw, HW))
    thw = ((thw + 127) // 128) * 128
    hw_pad = pl.cdiv(HW, thw) * thw
    if hw_pad != HW:
        x3 = jnp.pad(x3, ((0, 0), (0, 0), (0, hw_pad - HW)))

    w_mat = weight.reshape(Cout, Cin)                 # (Cout, Cin)
    b_col = bias.reshape(Cout, 1).astype(jnp.float32)  # (Cout, 1)

    out3 = pl.pallas_call(
        _det_head_kernel,
        out_shape=jax.ShapeDtypeStruct((B, Cout, hw_pad), out_dtype),
        grid_spec=pltpu.PrefetchScalarGridSpec(
            num_scalar_prefetch=0,
            grid=(B, hw_pad // thw),
            in_specs=[
                pl.BlockSpec((None, Cin, thw), lambda b, j: (b, 0, j)),
                pl.BlockSpec((Cout, Cin), lambda b, j: (0, 0)),
                pl.BlockSpec((Cout, 1), lambda b, j: (0, 0)),
            ],
            out_specs=pl.BlockSpec((None, Cout, thw), lambda b, j: (b, 0, j)),
        ),
        compiler_params=pltpu.CompilerParams(
            dimension_semantics=("parallel", "parallel")),
    )(x3, w_mat, b_col)

    # (B, Cout, H*W) is already the NCHW conv output; reproduce
    # torch: view(B, A, 5+C, H, W).permute(0, 1, 3, 4, 2).
    out = out3[:, :, :HW].reshape(B, num_anchors, 5 + num_classes, H, W)
    out = jnp.transpose(out, (0, 1, 3, 4, 2))
    return out


# ----------------------------- Plain-JAX backbone glue -----------------------------

def _conv2d_nchw(x, w, b, stride, padding):
    y = lax.conv_general_dilated(
        x, w, window_strides=(stride, stride),
        padding=((padding, padding), (padding, padding)),
        dimension_numbers=("NCHW", "OIHW", "NCHW"))
    return y + b[None, :, None, None]


def _bn_relu(x, gamma, beta, mean, var, eps=1e-5):
    inv = gamma * lax.rsqrt(var + eps)
    y = (x - mean[None, :, None, None]) * inv[None, :, None, None] + beta[None, :, None, None]
    return jnp.maximum(y, 0.0)


def simple_backbone_forward(x, p):
    x = _bn_relu(_conv2d_nchw(x, p["w1"], p["b1"], 1, 1), *p["bn1"])
    x = _bn_relu(_conv2d_nchw(x, p["w2"], p["b2"], 2, 1), *p["bn2"])
    x = _bn_relu(_conv2d_nchw(x, p["w3"], p["b3"], 2, 1), *p["bn3"])
    return x


def simple_detector_forward(x_img, backbone_params, head_weight, head_bias,
                            num_anchors, num_classes, *, tile_hw=2048,
                            out_dtype=jnp.float32):
    feats = simple_backbone_forward(x_img, backbone_params)
    return detection_head_forward(feats, head_weight, head_bias,
                                  num_anchors, num_classes,
                                  tile_hw=tile_hw, out_dtype=out_dtype)


# ----------------------------- Pure-JAX reference -----------------------------

def _reference_head(feats, weight, bias, num_anchors, num_classes):
    B, Cin, H, W = feats.shape
    Cout = weight.shape[0]
    w_mat = weight.reshape(Cout, Cin)
    y = jnp.einsum("bchw,oc->bohw", feats, w_mat) + bias[None, :, None, None]
    y = y.reshape(B, num_anchors, 5 + num_classes, H, W)
    y = jnp.transpose(y, (0, 1, 3, 4, 2))
    return jax.nn.sigmoid(y)


if __name__ == "__main__":
    key = jax.random.PRNGKey(0)
    num_classes, num_anchors = 2, 3                  # module defaults -> Cout = 21
    cout = num_anchors * (5 + num_classes)
    B, H_img, W_img = 2, 64, 64                      # features: (2, 64, 16, 16)

    keys = jax.random.split(key, 6)
    x_img = jax.random.normal(keys[0], (B, 3, H_img, W_img), jnp.float32)

    def conv_w(k, o, i, kh, kw):
        fan_in = i * kh * kw
        return jax.random.normal(k, (o, i, kh, kw), jnp.float32) * (2.0 / fan_in) ** 0.5

    def bn_default(c):  # eval-mode defaults: gamma=1, beta=0, mean=0, var=1
        return (jnp.ones((c,), jnp.float32), jnp.zeros((c,), jnp.float32),
                jnp.zeros((c,), jnp.float32), jnp.ones((c,), jnp.float32))

    backbone_params = {
        "w1": conv_w(keys[1], 16, 3, 3, 3), "b1": jnp.zeros((16,), jnp.float32), "bn1": bn_default(16),
        "w2": conv_w(keys[2], 32, 16, 3, 3), "b2": jnp.zeros((32,), jnp.float32), "bn2": bn_default(32),
        "w3": conv_w(keys[3], 64, 32, 3, 3), "b3": jnp.zeros((64,), jnp.float32), "bn3": bn_default(64),
    }
    head_w = jax.random.normal(keys[4], (cout, 64, 1, 1), jnp.float32) * 0.05
    head_b = jax.random.normal(keys[5], (cout,), jnp.float32) * 0.05

    # Full SimpleDetector forward (Pallas head, f32 output).
    out = simple_detector_forward(x_img, backbone_params, head_w, head_b,
                                  num_anchors, num_classes)
    out = jax.block_until_ready(out)

    feats = simple_backbone_forward(x_img, backbone_params)
    ref = _reference_head(feats, head_w, head_b, num_anchors, num_classes)

    Hf, Wf = feats.shape[2], feats.shape[3]
    assert out.shape == (B, num_anchors, Hf, Wf, 5 + num_classes), out.shape
    assert jnp.allclose(out, ref, atol=1e-4, rtol=1e-4), "mismatch vs reference (f32)"

    # Optional bf16-output path (perf review item: halves output HBM traffic).
    out_bf16 = detection_head_forward(feats, head_w, head_b, num_anchors,
                                      num_classes, out_dtype=jnp.bfloat16)
    out_bf16 = jax.block_until_ready(out_bf16)
    assert jnp.allclose(out_bf16.astype(jnp.float32), ref, atol=1e-2, rtol=1e-2), \
        "mismatch vs reference (bf16)"

    print("KERNEL_OK")
</pallas_src>

<mosaic_0001>
module attributes {stable_mosaic.version = 11 : i64} {
  func.func @_det_head_kernel(%arg0: i32, %arg1: i32, %arg2: memref<1x64x256xf32, #tpu.memory_space<vmem>>, %arg3: memref<21x64xf32, #tpu.memory_space<vmem>>, %arg4: memref<21x1xf32, #tpu.memory_space<vmem>>, %arg5: memref<1x21x256xf32, #tpu.memory_space<vmem>>) attributes {dimension_semantics = [#tpu.dimension_semantics<parallel>, #tpu.dimension_semantics<parallel>], iteration_bounds = array<i64: 2, 1>, scalar_prefetch = 0 : i64, scratch_operands = 0 : i64, tpu.core_type = #tpu.core_type<tc>, window_params = [{transform_indices = @transform_0, window_bounds = array<i64: 1, 64, 256>}, {pipeline_mode = #tpu.pipeline_mode<synchronous>, transform_indices = @transform_1, window_bounds = array<i64: 21, 64>}, {pipeline_mode = #tpu.pipeline_mode<synchronous>, transform_indices = @transform_2, window_bounds = array<i64: 21, 1>}, {transform_indices = @transform_3, window_bounds = array<i64: 1, 21, 256>}]} {
    %c0 = arith.constant 0 : index
    %c0_0 = arith.constant 0 : index
    %0 = vector.load %arg3[%c0, %c0_0] : memref<21x64xf32, #tpu.memory_space<vmem>>, vector<21x64xf32>
    %c0_1 = arith.constant 0 : index
    %c0_2 = arith.constant 0 : index
    %c0_3 = arith.constant 0 : index
    %1 = vector.load %arg2[%c0_1, %c0_2, %c0_3] : memref<1x64x256xf32, #tpu.memory_space<vmem>>, vector<1x64x256xf32>
    %2 = vector.shape_cast %1 : vector<1x64x256xf32> to vector<64x256xf32>
    %cst = arith.constant dense<0.000000e+00> : vector<21x256xf32>
    %3 = tpu.matmul %0, %2, %cst {dimension_numbers = #tpu.dot_dimension_numbers<[1], [0], [0], [1], [0, 0, 1, 1], [], []>} : vector<21x64xf32>, vector<64x256xf32>, vector<21x256xf32> -> vector<21x256xf32>
    %c0_4 = arith.constant 0 : index
    %c0_5 = arith.constant 0 : index
    %4 = vector.load %arg4[%c0_4, %c0_5] : memref<21x1xf32, #tpu.memory_space<vmem>>, vector<21x1xf32>
    %5 = vector.broadcast %4 : vector<21x1xf32> to vector<21x256xf32>
    %6 = arith.addf %3, %5 : vector<21x256xf32>
    %7 = arith.negf %6 : vector<21x256xf32>
    %8 = math.exp %7 : vector<21x256xf32>
    %cst_6 = arith.constant 1.000000e+00 : f32
    %9 = vector.broadcast %cst_6 : f32 to vector<21x256xf32>
    %10 = arith.addf %9, %8 : vector<21x256xf32>
    %11 = arith.divf %9, %10 : vector<21x256xf32>
    %c0_7 = arith.constant 0 : index
    %c0_8 = arith.constant 0 : index
    %c0_9 = arith.constant 0 : index
    %12 = vector.load %arg5[%c0_7, %c0_8, %c0_9] : memref<1x21x256xf32, #tpu.memory_space<vmem>>, vector<1x21x256xf32>
    %13 = vector.shape_cast %12 : vector<1x21x256xf32> to vector<21x256xf32>
    %14 = vector.shape_cast %11 : vector<21x256xf32> to vector<1x21x256xf32>
    tpu.vector_store %arg5[%c0_7, %c0_8, %c0_9], %14 {strides = array<i32>} : memref<1x21x256xf32, #tpu.memory_space<vmem>>, vector<1x21x256xf32>,
    return
  }
  func.func @transform_0(%arg0: i32, %arg1: i32) -> (i32, i32, i32) {
    %c0_i32 = arith.constant 0 : i32
    %c0_i32_0 = arith.constant 0 : i32
    return %arg0, %c0_i32, %arg1 : i32, i32, i32
  }
  func.func @transform_1(%arg0: i32, %arg1: i32) -> (i32, i32) {
    %c0_i32 = arith.constant 0 : i32
    %c0_i32_0 = arith.constant 0 : i32
    %c0_i32_1 = arith.constant 0 : i32
    return %c0_i32, %c0_i32_0 : i32, i32
  }
  func.func @transform_2(%arg0: i32, %arg1: i32) -> (i32, i32) {
    %c0_i32 = arith.constant 0 : i32
    %c0_i32_0 = arith.constant 0 : i32
    %c0_i32_1 = arith.constant 0 : i32
    return %c0_i32, %c0_i32_0 : i32, i32
  }
  func.func @transform_3(%arg0: i32, %arg1: i32) -> (i32, i32, i32) {
    %c0_i32 = arith.constant 0 : i32
    %c0_i32_0 = arith.constant 0 : i32
    return %arg0, %c0_i32, %arg1 : i32, i32, i32
  }
}

</mosaic_0001>

<llo_original>
// kernel: tpu_custom_call.1
$region0: #{tpu_custom_call.1}
  #allocation0 [shape = 'u32[]', space=smem, size = 0x4, offset = 0x4, fixed_abs, tag = 'smem constant byte address 0x4 - core index']
  #allocation1 [shape = 'u32[72,128]{1,0:T(1,128)}', space=vmem, size = 0x9000, scoped, tag = 'internal scratch']
  %s0 = inlined_call_operand.hbm [shape: f32[2,64,256], index: 0, kind: input, shape index: {}]
  %s1 = inlined_call_operand.vmem [shape: f32[21,64], index: 1, kind: input, shape index: {}]
  %s2 = inlined_call_operand.vmem [shape: f32[21,1], index: 2, kind: input, shape index: {}]
  %s3 = inlined_call_operand.vmem [shape: f32[2,21,256], index: 3, kind: output, shape index: {}]
  %s4 = sld [smem:[#allocation0]]
  $region49: #{tpu_custom_call.1} parent=0
    _
  %s6 = ssub.s32 1, %s4
  %s7 = scalar_select 0, %s6, %s4
  $region1: #{tpu_custom_call.1} parent=0
    #allocation2 [shape = 'u8[131072]{0}', space=vmem, size = 0x20000, scoped, tag = 'input window, operand 0']
    #allocation3 [shape = 's32[2]{0}', space=sflag, size = 0x8, scoped, tag = 'scoped memory for tpu_custom_call.1']
    %8 = vsyncpa [#allocation3], 0
    %s9 = scalar_lea.sflag [#allocation3], 1
    %10 = vsyncpa %s9, 0
    loop: start=0, step=1, limit=4
    $region2: #{tpu_custom_call.1} parent=1 // loop_pre_header
      _
    $region3: #{tpu_custom_call.1} parent=1 // loop_header
      %s12 = sphi 0, %s16
      %p13 = scmp.ge.s32.totalorder %s12, 4
      %s19 = sphi 0, %s31
      %s20 = sphi 0, %s27
      %s21 = sphi 0, %s19
      %s22 = sphi 0, %s20
      %s23 = sphi 0, %s21
      %s24 = sphi 0, %s22
      %s36 = sphi 0, %s38
      %s39 = sphi 0, %s36
      %s40 = sphi 0, %s39
      %s56 = sphi 0, %s40
      %s60 = sphi 0, %s60
      %s62 = sphi 0, %s60
      %s63 = sphi 0, %s62
      %s77 = sphi 0, %s63
      %s81 = sphi 0, %s81
      %s83 = sphi 0, %s81
      %s84 = sphi 0, %s83
      %s98 = sphi 0, %s84
      %s106 = sphi 0, %s108
      %s109 = sphi 0, %s106
      %s110 = sphi 0, %s109
      %s126 = sphi 0, %s110
    $region4: #{tpu_custom_call.1} parent=1 // loop_header_branch
      %15 = sbr.rel (%p13) target = $region8
    $region5: #{tpu_custom_call.1} parent=1 // loop_body
      %s17 = ssub.s32 %s12, 1
      %s18 = ssub.s32 %s12, 2
      %s25 = sadd.s32 1, %s20
      %p26 = scmp.ge.s32.totalorder %s25, 1
      %s27 = scalar_select %p26, 0, %s25
      %s28 = sadd.s32 1, %s19
      %s29 = scalar_select %p26, %s28, %s19
      %p30 = scmp.ge.s32.totalorder %s29, 2
      %s31 = scalar_select %p30, 0, %s29
      %s32 = ssub.s32 %s19, %s31
      %s33 = ssub.s32 %s20, %s27
      %s34 = sor.u32 %s32, %s33
      %p35 = scmp.eq.s32.totalorder %s34, 0
      %s37 = sadd.s32 %s36, 1
      %s38 = scalar_select %p35, %s36, %s37
      %p41 = pneg %p35
      %p42 = scmp.eq.s32.totalorder %s12, 1
      %p43 = por %p41, %p42
      %p44 = scmp.ne.s32.totalorder %s36, %s39
      %p45 = scmp.eq.s32.totalorder %s12, 0
      %p46 = por %p44, %p45
      %p47 = scmp.ne.s32.totalorder %s36, %s39
      %p48 = scmp.eq.s32.totalorder %s17, 1
      %p49 = por %p47, %p48
      %p50 = scmp.ne.s32.totalorder %s39, %s40
      %p51 = scmp.eq.s32.totalorder %s17, 0
      %p52 = por %p50, %p51
      %p53 = scmp.ne.s32.totalorder %s39, %s40
      %p54 = scmp.eq.s32.totalorder %s18, 1
      %p55 = por %p53, %p54
      %p57 = scmp.ne.s32.totalorder %s40, %s56
      %p58 = scmp.eq.s32.totalorder %s18, 0
      %p59 = por %p57, %p58
      %s61 = sadd.s32 %s60, 1
      %p64 = scmp.eq.s32.totalorder %s12, 1
      %p65 = scmp.ne.s32.totalorder %s60, %s62
      %p66 = scmp.eq.s32.totalorder %s12, 0
      %p67 = por %p65, %p66
      %p68 = scmp.ne.s32.totalorder %s60, %s62
      %p69 = scmp.eq.s32.totalorder %s17, 1
      %p70 = por %p68, %p69
      %p71 = scmp.ne.s32.totalorder %s62, %s63
      %p72 = scmp.eq.s32.totalorder %s17, 0
      %p73 = por %p71, %p72
      %p74 = scmp.ne.s32.totalorder %s62, %s63
      %p75 = scmp.eq.s32.totalorder %s18, 1
      %p76 = por %p74, %p75
      %p78 = scmp.ne.s32.totalorder %s63, %s77
      %p79 = scmp.eq.s32.totalorder %s18, 0
      %p80 = por %p78, %p79
      %s82 = sadd.s32 %s81, 1
      %p85 = scmp.eq.s32.totalorder %s12, 1
      %p86 = scmp.ne.s32.totalorder %s81, %s83
      %p87 = scmp.eq.s32.totalorder %s12, 0
      %p88 = por %p86, %p87
      %p89 = scmp.ne.s32.totalorder %s81, %s83
      %p90 = scmp.eq.s32.totalorder %s17, 1
      %p91 = por %p89, %p90
      %p92 = scmp.ne.s32.totalorder %s83, %s84
      %p93 = scmp.eq.s32.totalorder %s17, 0
      %p94 = por %p92, %p93
      %p95 = scmp.ne.s32.totalorder %s83, %s84
      %p96 = scmp.eq.s32.totalorder %s18, 1
      %p97 = por %p95, %p96
      %p99 = scmp.ne.s32.totalorder %s84, %s98
      %p100 = scmp.eq.s32.totalorder %s18, 0
      %p101 = por %p99, %p100
      %s102 = ssub.s32 %s19, %s31
      %s103 = ssub.s32 %s20, %s27
      %s104 = sor.u32 %s102, %s103
      %p105 = scmp.eq.s32.totalorder %s104, 0
      %s107 = sadd.s32 %s106, 1
      %s108 = scalar_select %p105, %s106, %s107
      %p111 = pneg %p105
      %p112 = scmp.eq.s32.totalorder %s12, 1
      %p113 = por %p111, %p112
      %p114 = scmp.ne.s32.totalorder %s106, %s109
      %p115 = scmp.eq.s32.totalorder %s12, 0
      %p116 = por %p114, %p115
      %p117 = scmp.ne.s32.totalorder %s106, %s109
      %p118 = scmp.eq.s32.totalorder %s17, 1
      %p119 = por %p117, %p118
      %p120 = scmp.ne.s32.totalorder %s109, %s110
      %p121 = scmp.eq.s32.totalorder %s17, 0
      %p122 = por %p120, %p121
      %p123 = scmp.ne.s32.totalorder %s109, %s110
      %p124 = scmp.eq.s32.totalorder %s18, 1
      %p125 = por %p123, %p124
      %p127 = scmp.ne.s32.totalorder %s110, %s126
      %p128 = scmp.eq.s32.totalorder %s18, 0
      %p129 = por %p127, %p128
      %p130 = scmp.le.s32.totalorder 1, %s12
      %p131 = scmp.lt.s32.totalorder %s12, 3
      %p132 = pnand %p130, %p131
      %p133 = pneg %p132
      // Predicated region
      $region9: #{tpu_custom_call.1} parent=5 // pred_check
        _
      $region10: #{tpu_custom_call.1} parent=5 // pred_check_branch
        %135 = sbr.rel (%p132) target = $region12
      $region11: #{tpu_custom_call.1} parent=5 // pred_region
        %s136 = ssub.s32 %s12, 1
        // Predicated region
        $region13: #{tpu_custom_call.1} parent=11 // pred_check
          %p137 = pneg %p73
        $region14: #{tpu_custom_call.1} parent=11 // pred_check_branch
          %139 = sbr.rel (%p137) target = $region16
        $region15: #{tpu_custom_call.1} parent=11 // pred_region
          _
        $region16: #{tpu_custom_call.1} parent=11 // pred_fallthru
          _
        // Predicated region
        $region17: #{tpu_custom_call.1} parent=11 // pred_check
          %p140 = pneg %p94
        $region18: #{tpu_custom_call.1} parent=11 // pred_check_branch
          %142 = sbr.rel (%p140) target = $region20
        $region19: #{tpu_custom_call.1} parent=11 // pred_region
          _
        $region20: #{tpu_custom_call.1} parent=11 // pred_fallthru
          _
      $region12: #{tpu_custom_call.1} parent=5 // pred_fallthru
        _
      %p143 = scmp.lt.s32.totalorder %s12, 2
      // Predicated region
      $region21: #{tpu_custom_call.1} parent=5 // pred_check
        %p144 = pneg %p143
      $region22: #{tpu_custom_call.1} parent=5 // pred_check_branch
        %146 = sbr.rel (%p144) target = $region24
      $region23: #{tpu_custom_call.1} parent=5 // pred_region
        // Predicated region
        $region25: #{tpu_custom_call.1} parent=23 // pred_check
          %p147 = pneg %p46
        $region26: #{tpu_custom_call.1} parent=23 // pred_check_branch
          %149 = sbr.rel (%p147) target = $region28
        $region27: #{tpu_custom_call.1} parent=23 // pred_region
          %s150 = sand.u32 %s36, 1
          %s151 = scalar_lea.sflag [#allocation3], %s150
          %s152 = sand.u32 %s36, 1
          %s153 = smul.addr %s152, 128
          %s154 = scalar_lea.vmem [#allocation2], %s153
          %s155 = smul.u32 2, %s20
          %157 = vsyncadd %s151, 0
          %s158 = smul.addr %s19, 16
          %s159 = sadd.s32 %s155, %s158
          %s160 = smul.addr %s159, 8
          %s161 = scalar_lea.hbm %s0, %s160
          %s162 = sshll.u32 %s161, 4
          %s163 = int_to_ptr.hbm [resolvable:$true] %s162
          %s164 = sshll.u32 %s154, 4
          %s165 = int_to_ptr.vmem [resolvable:$true] %s164
          %170 = dma.hbm_to_vmem [thread:$0]  %s163, 2048, %s165, %s151, 256, 256, 16
        $region28: #{tpu_custom_call.1} parent=23 // pred_fallthru
          _
      $region24: #{tpu_custom_call.1} parent=5 // pred_fallthru
        _
      %p171 = scmp.le.s32.totalorder 1, %s12
      %p172 = scmp.lt.s32.totalorder %s12, 3
      %p173 = pnand %p171, %p172
      %p174 = pneg %p173
      // Predicated region
      $region29: #{tpu_custom_call.1} parent=5 // pred_check
        _
      $region30: #{tpu_custom_call.1} parent=5 // pred_check_branch
        %176 = sbr.rel (%p173) target = $region32
      $region31: #{tpu_custom_call.1} parent=5 // pred_region
        %s177 = ssub.s32 %s12, 1
        %s178 = sand.u32 %s39, 1
        %s179 = scalar_lea.sflag [#allocation3], %s178
        %s180 = sand.u32 %s39, 1
        %s181 = smul.addr %s180, 128
        %s182 = scalar_lea.vmem [#allocation2], %s181
        // Predicated region
        $region33: #{tpu_custom_call.1} parent=31 // pred_check
          %p183 = pneg %p52
        $region34: #{tpu_custom_call.1} parent=31 // pred_check_branch
          %185 = sbr.rel (%p183) target = $region36
        $region35: #{tpu_custom_call.1} parent=31 // pred_region
          %187 = dma.done %s179, 2048
        $region36: #{tpu_custom_call.1} parent=31 // pred_fallthru
          _
        %s188 = sand.u32 %s39, 1
        %s189 = scalar_lea.sflag [#allocation3], %s188
        %s190 = sand.u32 %s39, 1
        %s191 = smul.addr %s190, 128
        %s192 = scalar_lea.vmem [#allocation2], %s191
        %p193 = pneg %p52
        %p194 = pneg %p49
        %p195 = pneg %p73
        %p196 = pneg %p70
        %p197 = pneg %p94
        %p198 = pneg %p91
        %p199 = pneg %p122
        %p200 = pneg %p119
        %s201 = smul.u32 2, %s22
        %p202 = scmp.lt.s32.totalorder %s21, 1
        %s203 = scalar_select %p202, %s21, 1
        %p204 = scmp.lt.s32.totalorder %s201, 1
        %s205 = scalar_select %p204, %s201, 1
        %s206 = smul.addr %s203, 6
        %s207 = sadd.s32 %s205, %s206
        %s208 = smul.addr %s207, 8
        %s209 = scalar_lea.vmem %s3, %s208
        %s210 = smul.u32 2, %s22
        %s211 = smul.u32 2, %s22
        %p212 = scmp.lt.s32.totalorder %s21, 1
        %s213 = scalar_select %p212, %s21, 1
        %p214 = scmp.lt.s32.totalorder %s211, 1
        %s215 = scalar_select %p214, %s211, 1
        %s216 = smul.addr %s213, 6
        %s217 = sadd.s32 %s215, %s216
        %s218 = smul.addr %s217, 8
        %s219 = scalar_lea.vmem %s3, %s218
        %s220 = smul.u32 2, %s22
        %v221 = vld [vmem:[%s1] sm:$0xff]
        %v222 = vld [vmem:[%s1 + $0x8] sm:$0xff]
        %v223 = vld [vmem:[%s1 + $0x10] sm:$0x1f]
        %v224 = vld [vmem:[%s182] sm:$0xff]
        %v225 = vld [vmem:[%s182 + $0x8] sm:$0xff]
        %v226 = vld [vmem:[%s182 + $0x10] sm:$0xff]
        %v227 = vld [vmem:[%s182 + $0x18] sm:$0xff]
        %v228 = vld [vmem:[%s182 + $0x20] sm:$0xff]
        %v229 = vld [vmem:[%s182 + $0x28] sm:$0xff]
        %v230 = vld [vmem:[%s182 + $0x30] sm:$0xff]
        %v231 = vld [vmem:[%s182 + $0x38] sm:$0xff]
        %v232 = vld [vmem:[%s182 + $0x40] sm:$0xff]
        %v233 = vld [vmem:[%s182 + $0x48] sm:$0xff]
        %v234 = vld [vmem:[%s182 + $0x50] sm:$0xff]
        %v235 = vld [vmem:[%s182 + $0x58] sm:$0xff]
        %v236 = vld [vmem:[%s182 + $0x60] sm:$0xff]
        %v237 = vld [vmem:[%s182 + $0x68] sm:$0xff]
        %v238 = vld [vmem:[%s182 + $0x70] sm:$0xff]
        %v239 = vld [vmem:[%s182 + $0x78] sm:$0xff]
        %v240 = vld [vmem:[%s2] sm:$0xff]
        %v241 = vld [vmem:[%s2 + $0x8] sm:$0xff]
        %v242 = vld [vmem:[%s2 + $0x10] sm:$0x1f]
        %244 = vset.pattern.permute.xlu0 0
        %245 = vperm.xlu0 %244, %v240
        %v246 = vpop.permute.xlu0 %245
        %249 = vset.pattern.permute.xlu0 0
        %250 = vperm.xlu0 %249, %v241
        %v251 = vpop.permute.xlu0 %250
        %254 = vset.pattern.permute.xlu0 0
        %255 = vperm.xlu0 %254, %v242
        %v256 = vpop.permute.xlu0 %255
        %vm258 = vcmask 523264
        %v260 = vsel %vm258, %v221, 0
        %v263 = vsel %vm258, %v222, 0
        %v266 = vsel %vm258, %v223, 0
        %268 = vmatpush.msra.mxu0 0.0
        %269 = vmatpush.msra.mxu0 0.0
        %270 = vmatpush.msra.mxu0 0.0
        %271 = vmatpush.msra.mxu0 0.0
        %272 = vmatpush.msra.mxu0 0.0
        %273 = vmatpush.msra.mxu0 0.0
        %274 = vmatpush.msra.mxu0 0.0
        %275 = vmatpush.msra.mxu0 0.0
        %276 = vmatpush.msra.mxu0 %v238
        %277 = vmatpush.msra.mxu0 %v236
        %278 = vmatpush.msra.mxu0 %v234
        %279 = vmatpush.msra.mxu0 %v232
        %280 = vmatpush.msra.mxu0 %v230
        %281 = vmatpush.msra.mxu0 %v228
        %282 = vmatpush.msra.mxu0 %v226
        %283 = vmatpush.msra.mxu0 %v224
        %284 = vmatmul.f32.gmra.mxu0 %v260
        %v285 = vpop.f32.mrf.mxu0
        %v286 = vadd.f32 %v246, %v285
        %287 = vmatmul.f32.gmra.mxu0 %v263
        %v288 = vpop.f32.mrf.mxu0
        %v289 = vadd.f32 %v251, %v288
        %290 = vmatmul.f32.gmra.mxu0 %v266
        %v291 = vpop.f32.mrf.mxu0
        %v292 = vadd.f32 %v256, %v291
        %293 = vdwg.mxu0
        %294 = vmatpush.msra.mxu0 0.0
        %295 = vmatpush.msra.mxu0 0.0
        %296 = vmatpush.msra.mxu0 0.0
        %297 = vmatpush.msra.mxu0 0.0
        %298 = vmatpush.msra.mxu0 0.0
        %299 = vmatpush.msra.mxu0 0.0
        %300 = vmatpush.msra.mxu0 0.0
        %301 = vmatpush.msra.mxu0 0.0
        %302 = vmatpush.msra.mxu0 %v239
        %303 = vmatpush.msra.mxu0 %v237
        %304 = vmatpush.msra.mxu0 %v235
        %305 = vmatpush.msra.mxu0 %v233
        %306 = vmatpush.msra.mxu0 %v231
        %307 = vmatpush.msra.mxu0 %v229
        %308 = vmatpush.msra.mxu0 %v227
        %309 = vmatpush.msra.mxu0 %v225
        %310 = vmatmul.f32.gmra.mxu0 %v260
        %v311 = vpop.f32.mrf.mxu0
        %v312 = vadd.f32 %v246, %v311
        %313 = vmatmul.f32.gmra.mxu0 %v263
        %v314 = vpop.f32.mrf.mxu0
        %v315 = vadd.f32 %v251, %v314
        %316 = vmatmul.f32.gmra.mxu0 %v266
        %v317 = vpop.f32.mrf.mxu0
        %v318 = vadd.f32 %v256, %v317
        %319 = vdwg.mxu0
        %v320 = vxor.u32 %v286, 2147483648
        %v321 = vxor.u32 %v312, 2147483648
        %v322 = vxor.u32 %v289, 2147483648
        %v323 = vxor.u32 %v315, 2147483648
        %v324 = vxor.u32 %v292, 2147483648
        %v325 = vxor.u32 %v318, 2147483648
        %v326 = vmul.f32 %v320, 1.442695
        %v327 = vpow.pop %v326
        %v328 = vmul.f32 %v321, 1.442695
        %v329 = vpow.pop %v328
        %v330 = vmul.f32 %v322, 1.442695
        %v331 = vpow.pop %v330
        %v332 = vmul.f32 %v323, 1.442695
        %v333 = vpow.pop %v332
        %v334 = vmul.f32 %v324, 1.442695
        %v335 = vpow.pop %v334
        %v336 = vmul.f32 %v325, 1.442695
        %v337 = vpow.pop %v336
        %v338 = vadd.f32 %v327, 1.0
        %v339 = vadd.f32 %v329, 1.0
        %v340 = vadd.f32 %v331, 1.0
        %v341 = vadd.f32 %v333, 1.0
        %v342 = vadd.f32 %v335, 1.0
        %v343 = vadd.f32 %v337, 1.0
        %v344 = vrcp.pop %v338
        %v345 = vmul.f32 %v338, %v344
        %v346 = vsub.f32 1.0, %v345
        %v347 = vmul.f32 %v344, %v346
        %v348 = vadd.f32 %v344, %v347
        %vm349 = vweird.f32 %v338
        %vm350 = vweird.f32 %v344
        %vm351 = vmor %vm349, %vm350
        %v352 = vsel %vm351, %v344, %v348
        %v353 = vand.u32 2147483647, %v338
        %vm354 = vcmp.eq.f32.partialorder %v353, 8.507059e+37
        %v355 = vand.u32 %v338, 2147483648
        %v356 = vor.u32 1.1754944e-38, %v355
        %v357 = vsel %vm354, %v356, %v352
        %v358 = vmul.f32 1.0, %v357
        %v359 = vrcp.pop %v339
        %v360 = vmul.f32 %v339, %v359
        %v361 = vsub.f32 1.0, %v360
        %v362 = vmul.f32 %v359, %v361
        %v363 = vadd.f32 %v359, %v362
        %vm364 = vweird.f32 %v339
        %vm365 = vweird.f32 %v359
        %vm366 = vmor %vm364, %vm365
        %v367 = vsel %vm366, %v359, %v363
        %v368 = vand.u32 2147483647, %v339
        %vm369 = vcmp.eq.f32.partialorder %v368, 8.507059e+37
        %v370 = vand.u32 %v339, 2147483648
        %v371 = vor.u32 1.1754944e-38, %v370
        %v372 = vsel %vm369, %v371, %v367
        %v373 = vmul.f32 1.0, %v372
        %v374 = vrcp.pop %v340
        %v375 = vmul.f32 %v340, %v374
        %v376 = vsub.f32 1.0, %v375
        %v377 = vmul.f32 %v374, %v376
        %v378 = vadd.f32 %v374, %v377
        %vm379 = vweird.f32 %v340
        %vm380 = vweird.f32 %v374
        %vm381 = vmor %vm379, %vm380
        %v382 = vsel %vm381, %v374, %v378
        %v383 = vand.u32 2147483647, %v340
        %vm384 = vcmp.eq.f32.partialorder %v383, 8.507059e+37
        %v385 = vand.u32 %v340, 2147483648
        %v386 = vor.u32 1.1754944e-38, %v385
        %v387 = vsel %vm384, %v386, %v382
        %v388 = vmul.f32 1.0, %v387
        %v389 = vrcp.pop %v341
        %v390 = vmul.f32 %v341, %v389
        %v391 = vsub.f32 1.0, %v390
        %v392 = vmul.f32 %v389, %v391
        %v393 = vadd.f32 %v389, %v392
        %vm394 = vweird.f32 %v341
        %vm395 = vweird.f32 %v389
        %vm396 = vmor %vm394, %vm395
        %v397 = vsel %vm396, %v389, %v393
        %v398 = vand.u32 2147483647, %v341
        %vm399 = vcmp.eq.f32.partialorder %v398, 8.507059e+37
        %v400 = vand.u32 %v341, 2147483648
        %v401 = vor.u32 1.1754944e-38, %v400
        %v402 = vsel %vm399, %v401, %v397
        %v403 = vmul.f32 1.0, %v402
        %v404 = vrcp.pop %v342
        %v405 = vmul.f32 %v342, %v404
        %v406 = vsub.f32 1.0, %v405
        %v407 = vmul.f32 %v404, %v406
        %v408 = vadd.f32 %v404, %v407
        %vm409 = vweird.f32 %v342
        %vm410 = vweird.f32 %v404
        %vm411 = vmor %vm409, %vm410
        %v412 = vsel %vm411, %v404, %v408
        %v413 = vand.u32 2147483647, %v342
        %vm414 = vcmp.eq.f32.partialorder %v413, 8.507059e+37
        %v415 = vand.u32 %v342, 2147483648
        %v416 = vor.u32 1.1754944e-38, %v415
        %v417 = vsel %vm414, %v416, %v412
        %v418 = vmul.f32 1.0, %v417
        %v419 = vrcp.pop %v343
        %v420 = vmul.f32 %v343, %v419
        %v421 = vsub.f32 1.0, %v420
        %v422 = vmul.f32 %v419, %v421
        %v423 = vadd.f32 %v419, %v422
        %vm424 = vweird.f32 %v343
        %vm425 = vweird.f32 %v419
        %vm426 = vmor %vm424, %vm425
        %v427 = vsel %vm426, %v419, %v423
        %v428 = vand.u32 2147483647, %v343
        %vm429 = vcmp.eq.f32.partialorder %v428, 8.507059e+37
        %v430 = vand.u32 %v343, 2147483648
        %v431 = vor.u32 1.1754944e-38, %v430
        %v432 = vsel %vm429, %v431, %v427
        %v433 = vmul.f32 1.0, %v432
        %434 = vst [vmem:[%s219] sm:$0xff] %v358
        %435 = vst [vmem:[%s219 + $0x8] sm:$0xff] %v373
        %436 = vst [vmem:[%s219 + $0x10] sm:$0xff] %v388
        %437 = vst [vmem:[%s219 + $0x18] sm:$0xff] %v403
        %438 = vst [vmem:[%s219 + $0x20] sm:$0x1f] %v418
        %439 = vst [vmem:[%s219 + $0x28] sm:$0x1f] %v433
        %s440 = smul.u32 2, %s22
        %p441 = scmp.lt.s32.totalorder %s21, 1
        %s442 = scalar_select %p441, %s21, 1
        %p443 = scmp.lt.s32.totalorder %s440, 1
        %s444 = scalar_select %p443, %s440, 1
        %s445 = smul.addr %s442, 6
        %s446 = sadd.s32 %s444, %s445
        %s447 = smul.addr %s446, 8
        %s448 = scalar_lea.vmem %s3, %s447
        // Predicated region
        $region37: #{tpu_custom_call.1} parent=31 // pred_check
          %p449 = pneg %p119
        $region38: #{tpu_custom_call.1} parent=31 // pred_check_branch
          %451 = sbr.rel (%p449) target = $region40
        $region39: #{tpu_custom_call.1} parent=31 // pred_region
          %s452 = smul.u32 2, %s22
        $region40: #{tpu_custom_call.1} parent=31 // pred_fallthru
          _
      $region32: #{tpu_custom_call.1} parent=5 // pred_fallthru
        _
      %p453 = scmp.le.s32.totalorder 2, %s12
      // Predicated region
      $region41: #{tpu_custom_call.1} parent=5 // pred_check
        %p454 = pneg %p453
      $region42: #{tpu_custom_call.1} parent=5 // pred_check_branch
        %456 = sbr.rel (%p454) target = $region44
      $region43: #{tpu_custom_call.1} parent=5 // pred_region
        %s457 = ssub.s32 %s12, 2
        // Predicated region
        $region45: #{tpu_custom_call.1} parent=43 // pred_check
          %p458 = pneg %p125
        $region46: #{tpu_custom_call.1} parent=43 // pred_check_branch
          %460 = sbr.rel (%p458) target = $region48
        $region47: #{tpu_custom_call.1} parent=43 // pred_region
          %s461 = smul.u32 2, %s24
          %p462 = scmp.lt.s32.totalorder %s23, 1
          %s463 = scalar_select %p462, %s23, 1
          %p464 = scmp.lt.s32.totalorder %s461, 1
          %s465 = scalar_select %p464, %s461, 1
          %s466 = smul.addr %s463, 6
          %s467 = sadd.s32 %s465, %s466
          %s468 = smul.addr %s467, 8
          %s469 = scalar_lea.vmem %s3, %s468
        $region48: #{tpu_custom_call.1} parent=43 // pred_fallthru
          _
      $region44: #{tpu_custom_call.1} parent=5 // pred_fallthru
        _
    $region6: #{tpu_custom_call.1} parent=1 // loop_footer
      %s16 = sadd.s32 1, %s12
    $region7: #{tpu_custom_call.1} parent=1 // loop_footer_branch
      %11 = sbr.rel target = $region3
    $region8: #{tpu_custom_call.1} parent=1 // loop_exit
      _
    %470 = vsyncpa [#allocation3], 1
    %s471 = scalar_lea.sflag [#allocation3], 1
    %472 = vsyncpa %s471, 1

</llo_original>
